<compile_context>
chip_gen: v5e
topology: v5e:2x2
jax: 0.10.0
libtpu: 0.0.40
codegen_flags: <defaults>
</compile_context>

<pallas_src>
import math

import jax
import jax.numpy as jnp
from jax.experimental import pallas as pl
from jax.experimental.pallas import tpu as pltpu


def _pos_enc_add_kernel(x_ref, pe_ref, o_ref):
    # x_ref / o_ref: (TILE_B, TILE_R, LANE); pe_ref: (TILE_R, LANE).
    # Broadcast add over the leading batch-tile dim (pe vregs reused).
    o_ref[...] = x_ref[...] + pe_ref[...]


def _choose_tiles(batch, rows, lane, itemsize, target_bytes):
    """Pick (tile_b, tile_rows) for blocks of shape (tile_b, tile_rows, lane)."""
    q_sub = 8 * max(1, 4 // itemsize)          # sublane quantum: 8 f32, 16 bf16, 32 int8
    row_bytes = lane * itemsize
    max_rows = max(1, target_bytes // row_bytes)
    if rows <= max_rows:
        tile_rows = rows                       # whole row extent fits in one block
    else:
        tile_rows = max(q_sub, (max_rows // q_sub) * q_sub)
        tile_rows = min(tile_rows, rows)
    # Fuse batch rows when a single-row block would be overhead-bound.
    tile_b = 1
    block_bytes = tile_rows * row_bytes
    if tile_rows == rows and 2 * block_bytes < target_bytes:
        tile_b = int(min(batch, max(1, target_bytes // block_bytes)))
    return tile_b, tile_rows


def positional_encoding_forward(x, pos_table):
    """x: (B, S, D); pos_table: (max_len, D) learnable table. Returns x + table[:S]."""
    B, S, D = x.shape
    max_len, D2 = pos_table.shape
    assert D2 == D and S <= max_len

    if pos_table.dtype != x.dtype:
        pos_table = pos_table.astype(x.dtype)
    itemsize = jnp.dtype(x.dtype).itemsize

    # --- choose layout ------------------------------------------------------
    flat = S * D
    if flat >= 128 and flat % 128 == 0:
        # Lane-dense main path: flatten (S, D) -> (rows, 128).  Reshapes of
        # contiguous row-major slabs are free.
        lane = 128
        rows = flat // 128
        x2 = x.reshape(B, rows, lane)
        if (max_len * D) % 128 == 0:
            pe2 = pos_table.reshape((max_len * D) // 128, lane)  # no copy, no slice
        else:
            pe2 = jax.lax.slice(pos_table, (0, 0), (S, D)).reshape(rows, lane)
        needs_reshape_back = True
    else:
        # Fallback for ragged S*D: keep (S, D) layout (masked lane stores when
        # D is not a multiple of 128), still cdiv-tiled along the sequence axis.
        lane = D
        rows = S
        x2 = x
        pe2 = pos_table          # index_map only addresses the first ceil(S/tile) blocks
        needs_reshape_back = False

    # --- per-generation sizing ----------------------------------------------
    try:
        vmem_cap = int(pltpu.get_tpu_info().vmem_capacity_bytes)
    except Exception:
        vmem_cap = 64 << 20      # conservative default (v7x per-TensorCore VMEM)
    target_bytes = (8 << 20) if vmem_cap >= (100 << 20) else (4 << 20)

    tile_b, tile_rows = _choose_tiles(B, rows, lane, itemsize, target_bytes)

    # BlockSpec legality: second-to-last block dim must be a multiple of 8 or
    # equal the array's full extent.  When we took the full (ragged) row extent,
    # make the pe array's extent match exactly (tiny one-off slice copy).
    if tile_rows % 8 != 0 and pe2.shape[0] != rows:
        pe2 = jax.lax.slice(pe2, (0, 0), (rows, lane))

    num_r = pl.cdiv(rows, tile_rows)
    num_b = pl.cdiv(B, tile_b)
    grid = (num_r, num_b)        # batch innermost -> pe tile reused, not re-DMA'd

    # Double-buffered x + out + pe, plus headroom; never exceeds the chip's VMEM.
    x_block_bytes = tile_b * tile_rows * lane * itemsize
    pe_block_bytes = tile_rows * lane * itemsize
    budget = 4 * x_block_bytes + 2 * pe_block_bytes + (2 << 20)
    vmem_limit = int(min(max(budget, 8 << 20), max(vmem_cap - (8 << 20), 32 << 20)))

    out = pl.pallas_call(
        _pos_enc_add_kernel,
        out_shape=jax.ShapeDtypeStruct((B, rows, lane), x.dtype),
        grid=grid,
        in_specs=[
            pl.BlockSpec((tile_b, tile_rows, lane), lambda r, b: (b, r, 0)),
            pl.BlockSpec((tile_rows, lane), lambda r, b: (r, 0)),
        ],
        out_specs=pl.BlockSpec((tile_b, tile_rows, lane), lambda r, b: (b, r, 0)),
        compiler_params=pltpu.CompilerParams(
            dimension_semantics=("parallel", "parallel"),
            vmem_limit_bytes=vmem_limit,
        ),
    )(x2, pe2)

    if needs_reshape_back:
        out = out.reshape(B, S, D)
    return out


def init_learnable_encoding(key, max_len, embed_dim, dtype=jnp.float32):
    """Xavier-uniform init for a (max_len, embed_dim) parameter (matches nn.init.xavier_uniform_)."""
    bound = math.sqrt(6.0 / (max_len + embed_dim))
    return jax.random.uniform(key, (max_len, embed_dim), dtype=dtype,
                              minval=-bound, maxval=bound)


if __name__ == "__main__":
    key = jax.random.PRNGKey(0)
    k_x, k_p, k_x2 = jax.random.split(key, 3)

    MAX_LEN = 64  # small stand-in for max_len=5000

    # Primary check: lane-dense main path (S*D % 128 == 0).
    B, S, D = 2, 8, 32
    x = jax.random.normal(k_x, (B, S, D), dtype=jnp.float32)
    pos_table = init_learnable_encoding(k_p, MAX_LEN, D)
    out = jax.block_until_ready(positional_encoding_forward(x, pos_table))
    ref = x + pos_table[:S][None, :, :]
    assert out.shape == (B, S, D)
    assert jnp.allclose(out, ref, atol=1e-6), "mismatch vs reference (main path)"

    # Secondary check: ragged fallback path (S*D not a multiple of 128).
    B2, S2, D2 = 3, 10, 24
    x2 = jax.random.normal(k_x2, (B2, S2, D2), dtype=jnp.float32)
    pos_table2 = init_learnable_encoding(k_p, MAX_LEN, D2)
    out2 = jax.block_until_ready(positional_encoding_forward(x2, pos_table2))
    ref2 = x2 + pos_table2[:S2][None, :, :]
    assert jnp.allclose(out2, ref2, atol=1e-6), "mismatch vs reference (fallback path)"

    print("KERNEL_OK")
</pallas_src>

<mosaic_0001>
module attributes {stable_mosaic.version = 11 : i64} {
  func.func @_pos_enc_add_kernel(%arg0: i32, %arg1: i32, %arg2: memref<2x2x128xf32, #tpu.memory_space<vmem>>, %arg3: memref<2x128xf32, #tpu.memory_space<vmem>>, %arg4: memref<2x2x128xf32, #tpu.memory_space<vmem>>) attributes {dimension_semantics = [#tpu.dimension_semantics<parallel>, #tpu.dimension_semantics<parallel>], iteration_bounds = array<i64: 1, 1>, scalar_prefetch = 0 : i64, scratch_operands = 0 : i64, tpu.core_type = #tpu.core_type<tc>, window_params = [{transform_indices = @transform_0, window_bounds = array<i64: 2, 2, 128>}, {transform_indices = @transform_1, window_bounds = array<i64: 2, 128>}, {transform_indices = @transform_2, window_bounds = array<i64: 2, 2, 128>}]} {
    %c0 = arith.constant 0 : index
    %c0_0 = arith.constant 0 : index
    %c0_1 = arith.constant 0 : index
    %0 = vector.load %arg2[%c0, %c0_0, %c0_1] : memref<2x2x128xf32, #tpu.memory_space<vmem>>, vector<2x2x128xf32>
    %c0_2 = arith.constant 0 : index
    %c0_3 = arith.constant 0 : index
    %1 = vector.load %arg3[%c0_2, %c0_3] : memref<2x128xf32, #tpu.memory_space<vmem>>, vector<2x128xf32>
    %2 = vector.shape_cast %1 : vector<2x128xf32> to vector<1x2x128xf32>
    %3 = vector.broadcast %2 : vector<1x2x128xf32> to vector<2x2x128xf32>
    %4 = arith.addf %0, %3 : vector<2x2x128xf32>
    %c0_4 = arith.constant 0 : index
    %c0_5 = arith.constant 0 : index
    %c0_6 = arith.constant 0 : index
    %5 = vector.load %arg4[%c0_4, %c0_5, %c0_6] : memref<2x2x128xf32, #tpu.memory_space<vmem>>, vector<2x2x128xf32>
    tpu.vector_store %arg4[%c0_4, %c0_5, %c0_6], %4 {strides = array<i32>} : memref<2x2x128xf32, #tpu.memory_space<vmem>>, vector<2x2x128xf32>,
    return
  }
  func.func @transform_0(%arg0: i32, %arg1: i32) -> (i32, i32, i32) {
    %c0_i32 = arith.constant 0 : i32
    %c0_i32_0 = arith.constant 0 : i32
    return %arg1, %arg0, %c0_i32 : i32, i32, i32
  }
  func.func @transform_1(%arg0: i32, %arg1: i32) -> (i32, i32) {
    %c0_i32 = arith.constant 0 : i32
    %c0_i32_0 = arith.constant 0 : i32
    return %arg0, %c0_i32 : i32, i32
  }
  func.func @transform_2(%arg0: i32, %arg1: i32) -> (i32, i32, i32) {
    %c0_i32 = arith.constant 0 : i32
    %c0_i32_0 = arith.constant 0 : i32
    return %arg1, %arg0, %c0_i32 : i32, i32, i32
  }
}

</mosaic_0001>

<llo_original>
// kernel: tpu_custom_call.1
$region0: #{tpu_custom_call.1}
  #allocation0 [shape = 'u32[]', space=smem, size = 0x4, offset = 0x4, fixed_abs, tag = 'smem constant byte address 0x4 - core index']
  #allocation1 [shape = 'u32[72,128]{1,0:T(1,128)}', space=vmem, size = 0x9000, scoped, tag = 'internal scratch']
  %s0 = inlined_call_operand.hbm [shape: f32[2,2,128], index: 0, kind: input, shape index: {}]
  %s1 = inlined_call_operand.hbm [shape: f32[2,128], index: 1, kind: input, shape index: {}]
  %s2 = inlined_call_operand.hbm [shape: f32[2,2,128], index: 2, kind: output, shape index: {}]
  %s3 = sld [smem:[#allocation0]]
  $region26: #{tpu_custom_call.1} parent=0
    _
  %s5 = ssub.s32 1, %s3
  %s6 = scalar_select 0, %s5, %s3
  $region1: #{tpu_custom_call.1} parent=0
    #allocation2 [shape = 'u8[2048]{0}', space=vmem, size = 0x800, scoped, tag = 'input window, operand 0, single buffered']
    #allocation3 [shape = 's32[1]{0}', space=sflag, size = 0x4, scoped, tag = 'scoped memory for tpu_custom_call.1']
    #allocation4 [shape = 's32[1]{0}', space=sflag, size = 0x4, scoped, tag = 'scoped memory for tpu_custom_call.1']
    #allocation5 [shape = 'u8[1024]{0}', space=vmem, size = 0x400, scoped, tag = 'input window, operand 1, single buffered']
    #allocation6 [shape = 's32[1]{0}', space=sflag, size = 0x4, scoped, tag = 'scoped memory for tpu_custom_call.1']
    #allocation7 [shape = 'u8[2048]{0}', space=vmem, size = 0x800, scoped, tag = 'output window, operand 0, single buffered']
    %7 = vsyncpa [#allocation3], 0
    %8 = vsyncpa [#allocation6], 0
    %9 = vsyncpa [#allocation4], 0
    // Predicated region
    $region2: #{tpu_custom_call.1} parent=1 // pred_check
      _
    $region3: #{tpu_custom_call.1} parent=1 // pred_check_branch
      %11 = sbr.rel (0) target = $region5
    $region4: #{tpu_custom_call.1} parent=1 // pred_region
      %13 = vsyncadd [#allocation3], 0
      %s14 = sshll.u32 %s0, 4
      %s15 = int_to_ptr.hbm [resolvable:$true] %s14
      %s16 = sshll.u32 [#allocation2], 4
      %s17 = int_to_ptr.vmem [resolvable:$true] %s16
      %22 = dma.hbm_to_vmem [thread:$0]  %s15, 64, %s17, [#allocation3], 32, 32, 2
    $region5: #{tpu_custom_call.1} parent=1 // pred_fallthru
      _
    // Predicated region
    $region6: #{tpu_custom_call.1} parent=1 // pred_check
      _
    $region7: #{tpu_custom_call.1} parent=1 // pred_check_branch
      %24 = sbr.rel (0) target = $region9
    $region8: #{tpu_custom_call.1} parent=1 // pred_region
      %26 = vsyncadd [#allocation6], 0
      %s28 = sshll.u32 %s1, 4
      %s29 = int_to_ptr.hbm [resolvable:$true] %s28
      %s30 = sshll.u32 [#allocation5], 4
      %s31 = int_to_ptr.vmem [resolvable:$true] %s30
      %33 = dma.hbm_to_vmem [thread:$0]  %s29, 32, %s31, [#allocation6]
    $region9: #{tpu_custom_call.1} parent=1 // pred_fallthru
      _
    // Predicated region
    $region10: #{tpu_custom_call.1} parent=1 // pred_check
      _
    $region11: #{tpu_custom_call.1} parent=1 // pred_check_branch
      %35 = sbr.rel (0) target = $region13
    $region12: #{tpu_custom_call.1} parent=1 // pred_region
      %37 = dma.done [#allocation3], 64
    $region13: #{tpu_custom_call.1} parent=1 // pred_fallthru
      _
    // Predicated region
    $region14: #{tpu_custom_call.1} parent=1 // pred_check
      _
    $region15: #{tpu_custom_call.1} parent=1 // pred_check_branch
      %39 = sbr.rel (0) target = $region17
    $region16: #{tpu_custom_call.1} parent=1 // pred_region
      %41 = dma.done [#allocation6], 32
    $region17: #{tpu_custom_call.1} parent=1 // pred_fallthru
      _
    %v42 = vld [vmem:[#allocation2] sm:$0x3]
    %v43 = vld [vmem:[#allocation2 + $0x2] sm:$0x3]
    %v44 = vld [vmem:[#allocation5] sm:$0x3]
    %v45 = vadd.f32 %v42, %v44
    %v46 = vadd.f32 %v43, %v44
    %47 = vst [vmem:[#allocation7] sm:$0x3] %v45
    %48 = vst [vmem:[#allocation7 + $0x2] sm:$0x3] %v46
    // Predicated region
    $region18: #{tpu_custom_call.1} parent=1 // pred_check
      _
    $region19: #{tpu_custom_call.1} parent=1 // pred_check_branch
      %50 = sbr.rel (0) target = $region21
    $region20: #{tpu_custom_call.1} parent=1 // pred_region
      %52 = vsyncadd [#allocation4], 0
      %s53 = sshll.u32 [#allocation7], 4
      %s54 = int_to_ptr.vmem [resolvable:$true] %s53
      %s55 = sshll.u32 %s2, 4
      %s56 = int_to_ptr.hbm [resolvable:$true] %s55
      %61 = dma.vmem_to_hbm [thread:$0]  %s54, 64, %s56, [#allocation4], 32, 32, 2
    $region21: #{tpu_custom_call.1} parent=1 // pred_fallthru
      _
    // Predicated region
    $region22: #{tpu_custom_call.1} parent=1 // pred_check
      _
    $region23: #{tpu_custom_call.1} parent=1 // pred_check_branch
      %63 = sbr.rel (0) target = $region25
    $region24: #{tpu_custom_call.1} parent=1 // pred_region
      %65 = dma.done [#allocation4], 64
    $region25: #{tpu_custom_call.1} parent=1 // pred_fallthru
      _
    %66 = vsyncpa [#allocation3], 1
    %67 = vsyncpa [#allocation6], 1
    %68 = vsyncpa [#allocation4], 1

</llo_original>
